<compile_context>
chip_gen: v7x
topology: tpu7x:2x2x1
jax: 0.10.0
libtpu: 0.0.40
codegen_flags: <defaults>
</compile_context>

<pallas_src>
from functools import partial

import jax
import jax.numpy as jnp
from jax.experimental import pallas as pl
from jax.experimental.pallas import tpu as pltpu

# Small shapes consistent with the module (production: in_nodes = masked_nnz,
# out_nodes = 1024, channels 1 -> 4, n_classes = len(meta['c2i'])).
N = 8                # batch
IN_NODES = 256       # node_sizes[0]
OUT_NODES = 128      # node_sizes[1]
C_OUT = 4            # channel_sizes[1]
N_CLASSES = 8        # len(meta['c2i'])
N_CLASSES_PAD = 128  # lane-dense kernel output (full 128-lane stores); sliced in wrapper


def _single_step_kernel(x_ref, w_ref, b_ref, out_ref):
    """Whole reduction fits one block: one MXU matmul + full-vreg bias add."""
    out_ref[...] = (
        jnp.dot(x_ref[...], w_ref[...], preferred_element_type=jnp.float32)
        + b_ref[...]
    )


def _k_tiled_kernel(x_ref, w_ref, b_ref, out_ref):
    """Grid axis 0 tiles the input-node (reduction) dim; out block is the accumulator."""
    k = pl.program_id(0)

    @pl.when(k == 0)
    def _():
        out_ref[...] = b_ref[...]

    out_ref[...] += jnp.dot(x_ref[...], w_ref[...],
                            preferred_element_type=jnp.float32)


def _head_matmul(x_p, w_p, b_b, k_eff, k_steps):
    n = x_p.shape[0]
    kernel = _single_step_kernel if k_steps == 1 else _k_tiled_kernel
    flops = 2 * n * x_p.shape[1] * N_CLASSES_PAD
    bytes_accessed = (x_p.size + w_p.size + b_b.size + n * N_CLASSES_PAD) * 4
    return pl.pallas_call(
        kernel,
        out_shape=jax.ShapeDtypeStruct((n, N_CLASSES_PAD), jnp.float32),
        grid_spec=pltpu.PrefetchScalarGridSpec(
            num_scalar_prefetch=0,
            grid=(k_steps,),
            in_specs=[
                pl.BlockSpec((n, k_eff), lambda k: (0, k)),                # x K-tile
                pl.BlockSpec((k_eff, N_CLASSES_PAD), lambda k: (k, 0)),    # folded weight
                pl.BlockSpec((n, N_CLASSES_PAD), lambda k: (0, 0)),        # folded bias
            ],
            out_specs=pl.BlockSpec((n, N_CLASSES_PAD), lambda k: (0, 0)),  # resident acc
        ),
        compiler_params=pltpu.CompilerParams(
            # K is a reduction axis (output revisited across it).
            dimension_semantics=("arbitrary",),
            # No vmem_limit_bytes: <=1.2 MiB double-buffered working set at K_TILE=1024,
            # well inside default scoped VMEM on v5e/v6e/v7x.
        ),
        cost_estimate=pl.CostEstimate(
            flops=flops, transcendentals=0, bytes_accessed=bytes_accessed),
    )(x_p, w_p, b_b)


@partial(jax.jit, static_argnames=("k_tile",))
def c4_smaller_classifier(x, adj, w_fgl, b_fgl, w_fc, b_fc, k_tile=1024):
    n, in_nodes = x.shape
    n_classes = w_fc.shape[-1]

    # Head fold: per-channel scale+bias + channel-major-flatten FC.
    w_eff = jnp.einsum("cj,cjk->jk", w_fgl, w_fc)                # (out_nodes, n_classes)
    b_eff = jnp.einsum("cj,cjk->k", b_fgl, w_fc) + b_fc.reshape(-1)

    # Dense-adjacency fold (weight prep).  TODO(synk): skip this fold if adj is handled
    # sparsely via a segmented-gather kernel instead of a dense matmul.
    w_big = adj.astype(jnp.float32) @ w_eff                      # (in_nodes, n_classes)

    # Lane-dense output: pad classes to 128; broadcast bias to (n, 128) = one full vreg.
    pad_c = N_CLASSES_PAD - n_classes
    w_big = jnp.pad(w_big, ((0, 0), (0, pad_c)))
    b_eff = jnp.pad(b_eff, ((0, pad_c),))
    b_b = jnp.broadcast_to(b_eff[None, :], (n, N_CLASSES_PAD))

    if in_nodes <= k_tile:
        # Single-step path: no grid loop overhead, no accumulator, no pl.when.
        k_eff, k_steps = in_nodes, 1
        x_p, w_p = x, w_big
    else:
        # K-tiled path for production in_nodes: pl.cdiv grid + zero-padded tail.
        assert k_tile % 128 == 0, "K tile must stay 128-lane aligned for the MXU"
        k_eff = k_tile
        k_steps = pl.cdiv(in_nodes, k_eff)
        pad_k = k_steps * k_eff - in_nodes
        x_p = jnp.pad(x, ((0, 0), (0, pad_k)))
        w_p = jnp.pad(w_big, ((0, pad_k), (0, 0)))

    out_pad = _head_matmul(x_p, w_p, b_b, k_eff, k_steps)
    return out_pad[:, :n_classes]


def ref_forward(x, adj, w_fgl, b_fgl, w_fc, b_fc):
    n = x.shape[0]
    c_out, out_nodes, n_classes = w_fc.shape
    z = x @ adj                                                # (n, out_nodes)
    y = z[:, None, :] * w_fgl[None] + b_fgl[None]              # (n, c, out_nodes)
    flat = y.reshape(n, c_out * out_nodes)                     # channel-major == .view(N,-1)
    return flat @ w_fc.reshape(c_out * out_nodes, n_classes) + b_fc


if __name__ == "__main__":
    key = jax.random.PRNGKey(0)
    kx, k1, k2, k3, k4, kx2, ka2 = jax.random.split(key, 7)

    # Deterministic parameter init (weight_norm at init == raw weight).
    w_fgl = 0.10 * jax.random.normal(k1, (C_OUT, OUT_NODES), jnp.float32)
    b_fgl = 0.10 * jax.random.normal(k2, (C_OUT, OUT_NODES), jnp.float32)
    w_fc = 0.05 * jax.random.normal(k3, (C_OUT, OUT_NODES, N_CLASSES), jnp.float32)
    b_fc = 0.05 * jax.random.normal(k4, (1, N_CLASSES), jnp.float32)

    # --- Test 1: shipped small shapes -> single-step (no-grid-overhead) path. ---
    x = jax.random.normal(kx, (N, IN_NODES), jnp.float32)
    blk = IN_NODES // OUT_NODES
    adj = (jnp.arange(IN_NODES)[:, None] // blk
           == jnp.arange(OUT_NODES)[None, :]).astype(jnp.float32)  # tree-pooling 0/1 adj

    out = jax.block_until_ready(c4_smaller_classifier(x, adj, w_fgl, b_fgl, w_fc, b_fc))
    ref = ref_forward(x, adj, w_fgl, b_fgl, w_fc, b_fc)
    assert out.shape == (N, N_CLASSES)
    assert jnp.allclose(out, ref, atol=2e-4, rtol=1e-4), "single-step kernel mismatch"

    # --- Test 2: exercise the K-tiled path with a non-multiple-of-K_TILE tail. ---
    IN_NODES2 = 320                                   # not a multiple of 128 -> padded tail
    x2 = jax.random.normal(kx2, (N, IN_NODES2), jnp.float32)
    adj2 = (jax.random.uniform(ka2, (IN_NODES2, OUT_NODES)) < 0.1).astype(jnp.float32)

    out2 = jax.block_until_ready(
        c4_smaller_classifier(x2, adj2, w_fgl, b_fgl, w_fc, b_fc, k_tile=128))
    ref2 = ref_forward(x2, adj2, w_fgl, b_fgl, w_fc, b_fc)
    assert out2.shape == (N, N_CLASSES)
    assert jnp.allclose(out2, ref2, atol=2e-4, rtol=1e-4), "K-tiled kernel mismatch"

    print("KERNEL_OK")
</pallas_src>

<mosaic_0001>
module attributes {stable_mosaic.version = 11 : i64} {
  func.func @_single_step_kernel(%arg0: i32, %arg1: memref<8x256xf32, #tpu.memory_space<vmem>>, %arg2: memref<256x128xf32, #tpu.memory_space<vmem>>, %arg3: memref<8x128xf32, #tpu.memory_space<vmem>>, %arg4: memref<8x128xf32, #tpu.memory_space<vmem>>) attributes {dimension_semantics = [#tpu.dimension_semantics<arbitrary>], iteration_bounds = array<i64: 1>, scalar_prefetch = 0 : i64, scratch_operands = 0 : i64, tpu.core_type = #tpu.core_type<tc>, window_params = [{transform_indices = @transform_0, window_bounds = array<i64: 8, 256>}, {transform_indices = @transform_1, window_bounds = array<i64: 256, 128>}, {pipeline_mode = #tpu.pipeline_mode<synchronous>, transform_indices = @transform_2, window_bounds = array<i64: 8, 128>}, {pipeline_mode = #tpu.pipeline_mode<synchronous>, transform_indices = @transform_3, window_bounds = array<i64: 8, 128>}]} {
    %c0 = arith.constant 0 : index
    %c0_0 = arith.constant 0 : index
    %0 = vector.load %arg1[%c0, %c0_0] : memref<8x256xf32, #tpu.memory_space<vmem>>, vector<8x256xf32>
    %c0_1 = arith.constant 0 : index
    %c0_2 = arith.constant 0 : index
    %1 = vector.load %arg2[%c0_1, %c0_2] : memref<256x128xf32, #tpu.memory_space<vmem>>, vector<256x128xf32>
    %cst = arith.constant dense<0.000000e+00> : vector<8x128xf32>
    %2 = tpu.matmul %0, %1, %cst {dimension_numbers = #tpu.dot_dimension_numbers<[1], [0], [0], [1], [0, 0, 1, 1], [], []>} : vector<8x256xf32>, vector<256x128xf32>, vector<8x128xf32> -> vector<8x128xf32>
    %c0_3 = arith.constant 0 : index
    %c0_4 = arith.constant 0 : index
    %3 = vector.load %arg3[%c0_3, %c0_4] : memref<8x128xf32, #tpu.memory_space<vmem>>, vector<8x128xf32>
    %4 = arith.addf %2, %3 : vector<8x128xf32>
    %c0_5 = arith.constant 0 : index
    %c0_6 = arith.constant 0 : index
    %5 = vector.load %arg4[%c0_5, %c0_6] : memref<8x128xf32, #tpu.memory_space<vmem>>, vector<8x128xf32>
    tpu.vector_store %arg4[%c0_5, %c0_6], %4 {strides = array<i32>} : memref<8x128xf32, #tpu.memory_space<vmem>>, vector<8x128xf32>,
    return
  }
  func.func @transform_0(%arg0: i32) -> (i32, i32) {
    %c0_i32 = arith.constant 0 : i32
    %c0_i32_0 = arith.constant 0 : i32
    return %c0_i32, %arg0 : i32, i32
  }
  func.func @transform_1(%arg0: i32) -> (i32, i32) {
    %c0_i32 = arith.constant 0 : i32
    %c0_i32_0 = arith.constant 0 : i32
    return %arg0, %c0_i32 : i32, i32
  }
  func.func @transform_2(%arg0: i32) -> (i32, i32) {
    %c0_i32 = arith.constant 0 : i32
    %c0_i32_0 = arith.constant 0 : i32
    %c0_i32_1 = arith.constant 0 : i32
    return %c0_i32, %c0_i32_0 : i32, i32
  }
  func.func @transform_3(%arg0: i32) -> (i32, i32) {
    %c0_i32 = arith.constant 0 : i32
    %c0_i32_0 = arith.constant 0 : i32
    %c0_i32_1 = arith.constant 0 : i32
    return %c0_i32, %c0_i32_0 : i32, i32
  }
}

</mosaic_0001>

<llo_original>
// kernel: c4_smaller_classifier.1
$region0: #{c4_smaller_classifier.1}
  #allocation0 [shape = 'u32[]', space=smem, size = 0x4, offset = 0x4, fixed_abs, tag = 'smem constant byte address 0x4 - core index']
  #allocation1 [shape = 'u32[144,128]{1,0:T(1,128)}', space=vmem, size = 0x12000, scoped, tag = 'internal scratch']
  %s0 = inlined_call_operand.vmem [shape: f32[8,256], index: 0, kind: input, shape index: {}]
  %s1 = inlined_call_operand.vmem [shape: f32[256,128], index: 1, kind: input, shape index: {}]
  %s2 = inlined_call_operand.vmem [shape: f32[8,128], index: 2, kind: input, shape index: {}]
  %s3 = inlined_call_operand.hbm [shape: f32[8,128], index: 3, kind: output, shape index: {}]
  %s4 = sld [smem:[#allocation0]]
  $region22: #{c4_smaller_classifier.1} parent=0
    _
  %s6 = ssub.s32 1, %s4
  %s7 = scalar_select 0, %s6, %s4
  $region1: #{c4_smaller_classifier.1} parent=0
    #allocation2 [shape = 'u8[4096]{0}', space=vmem, size = 0x1000, scoped, tag = 'output window, operand 0, single buffered']
    #allocation3 [shape = 's32[1]{0}', space=sflag, size = 0x4, scoped, tag = 'scoped memory for c4_smaller_classifier.1']
    %8 = vsyncpa [#allocation3], 0
    // Predicated region
    $region2: #{c4_smaller_classifier.1} parent=1 // pred_check
      _
    $region3: #{c4_smaller_classifier.1} parent=1 // pred_check_branch
      %10 = sbr.rel (0) target = $region5
    $region4: #{c4_smaller_classifier.1} parent=1 // pred_region
      _
    $region5: #{c4_smaller_classifier.1} parent=1 // pred_fallthru
      _
    // Predicated region
    $region6: #{c4_smaller_classifier.1} parent=1 // pred_check
      _
    $region7: #{c4_smaller_classifier.1} parent=1 // pred_check_branch
      %12 = sbr.rel (0) target = $region9
    $region8: #{c4_smaller_classifier.1} parent=1 // pred_region
      _
    $region9: #{c4_smaller_classifier.1} parent=1 // pred_fallthru
      _
    // Predicated region
    $region10: #{c4_smaller_classifier.1} parent=1 // pred_check
      _
    $region11: #{c4_smaller_classifier.1} parent=1 // pred_check_branch
      %14 = sbr.rel (0) target = $region13
    $region12: #{c4_smaller_classifier.1} parent=1 // pred_region
      _
    $region13: #{c4_smaller_classifier.1} parent=1 // pred_fallthru
      _
    %v15 = vld [vmem:[%s0] sm:$0xff]
    %v16 = vld [vmem:[%s0 + $0x8] sm:$0xff]
    %v17 = vld [vmem:[%s1] sm:$0xff]
    %v18 = vld [vmem:[%s1 + $0x8] sm:$0xff]
    %v19 = vld [vmem:[%s1 + $0x10] sm:$0xff]
    %v20 = vld [vmem:[%s1 + $0x18] sm:$0xff]
    %v21 = vld [vmem:[%s1 + $0x20] sm:$0xff]
    %v22 = vld [vmem:[%s1 + $0x28] sm:$0xff]
    %v23 = vld [vmem:[%s1 + $0x30] sm:$0xff]
    %v24 = vld [vmem:[%s1 + $0x38] sm:$0xff]
    %v25 = vld [vmem:[%s1 + $0x40] sm:$0xff]
    %v26 = vld [vmem:[%s1 + $0x48] sm:$0xff]
    %v27 = vld [vmem:[%s1 + $0x50] sm:$0xff]
    %v28 = vld [vmem:[%s1 + $0x58] sm:$0xff]
    %v29 = vld [vmem:[%s1 + $0x60] sm:$0xff]
    %v30 = vld [vmem:[%s1 + $0x68] sm:$0xff]
    %v31 = vld [vmem:[%s1 + $0x70] sm:$0xff]
    %v32 = vld [vmem:[%s1 + $0x78] sm:$0xff]
    %v33 = vld [vmem:[%s1 + $0x80] sm:$0xff]
    %v34 = vld [vmem:[%s1 + $0x88] sm:$0xff]
    %v35 = vld [vmem:[%s1 + $0x90] sm:$0xff]
    %v36 = vld [vmem:[%s1 + $0x98] sm:$0xff]
    %v37 = vld [vmem:[%s1 + $0xa0] sm:$0xff]
    %v38 = vld [vmem:[%s1 + $0xa8] sm:$0xff]
    %v39 = vld [vmem:[%s1 + $0xb0] sm:$0xff]
    %v40 = vld [vmem:[%s1 + $0xb8] sm:$0xff]
    %v41 = vld [vmem:[%s1 + $0xc0] sm:$0xff]
    %v42 = vld [vmem:[%s1 + $0xc8] sm:$0xff]
    %v43 = vld [vmem:[%s1 + $0xd0] sm:$0xff]
    %v44 = vld [vmem:[%s1 + $0xd8] sm:$0xff]
    %v45 = vld [vmem:[%s1 + $0xe0] sm:$0xff]
    %v46 = vld [vmem:[%s1 + $0xe8] sm:$0xff]
    %v47 = vld [vmem:[%s1 + $0xf0] sm:$0xff]
    %v48 = vld [vmem:[%s1 + $0xf8] sm:$0xff]
    %v49 = vld [vmem:[%s2] sm:$0xff]
    %50 = vmatprep.subr.mxu0 0.0
    %51 = vmatpush1.msra.mxu0 %v17
    %52 = vmatprep.subr.mxu0 0.0
    %53 = vmatpush1.msra.mxu0 %v18
    %54 = vmatprep.subr.mxu0 0.0
    %55 = vmatpush1.msra.mxu0 %v19
    %56 = vmatprep.subr.mxu0 0.0
    %57 = vmatpush1.msra.mxu0 %v20
    %58 = vmatprep.subr.mxu0 0.0
    %59 = vmatpush1.msra.mxu0 %v21
    %60 = vmatprep.subr.mxu0 0.0
    %61 = vmatpush1.msra.mxu0 %v22
    %62 = vmatprep.subr.mxu0 0.0
    %63 = vmatpush1.msra.mxu0 %v23
    %64 = vmatprep.subr.mxu0 0.0
    %65 = vmatpush1.msra.mxu0 %v24
    %66 = vmatprep.subr.mxu0 0.0
    %67 = vmatpush1.msra.mxu0 %v25
    %68 = vmatprep.subr.mxu0 0.0
    %69 = vmatpush1.msra.mxu0 %v26
    %70 = vmatprep.subr.mxu0 0.0
    %71 = vmatpush1.msra.mxu0 %v27
    %72 = vmatprep.subr.mxu0 0.0
    %73 = vmatpush1.msra.mxu0 %v28
    %74 = vmatprep.subr.mxu0 0.0
    %75 = vmatpush1.msra.mxu0 %v29
    %76 = vmatprep.subr.mxu0 0.0
    %77 = vmatpush1.msra.mxu0 %v30
    %78 = vmatprep.subr.mxu0 0.0
    %79 = vmatpush1.msra.mxu0 %v31
    %80 = vmatprep.subr.mxu0 0.0
    %81 = vmatpush1.msra.mxu0 %v32
    %82 = vmatprep.subr.mxu0 0.0
    %83 = vmatpush1.msra.mxu0 %v33
    %84 = vmatprep.subr.mxu0 0.0
    %85 = vmatpush1.msra.mxu0 %v34
    %86 = vmatprep.subr.mxu0 0.0
    %87 = vmatpush1.msra.mxu0 %v35
    %88 = vmatprep.subr.mxu0 0.0
    %89 = vmatpush1.msra.mxu0 %v36
    %90 = vmatprep.subr.mxu0 0.0
    %91 = vmatpush1.msra.mxu0 %v37
    %92 = vmatprep.subr.mxu0 0.0
    %93 = vmatpush1.msra.mxu0 %v38
    %94 = vmatprep.subr.mxu0 0.0
    %95 = vmatpush1.msra.mxu0 %v39
    %96 = vmatprep.subr.mxu0 0.0
    %97 = vmatpush1.msra.mxu0 %v40
    %98 = vmatprep.subr.mxu0 0.0
    %99 = vmatpush1.msra.mxu0 %v41
    %100 = vmatprep.subr.mxu0 0.0
    %101 = vmatpush1.msra.mxu0 %v42
    %102 = vmatprep.subr.mxu0 0.0
    %103 = vmatpush1.msra.mxu0 %v43
    %104 = vmatprep.subr.mxu0 0.0
    %105 = vmatpush1.msra.mxu0 %v44
    %106 = vmatprep.subr.mxu0 0.0
    %107 = vmatpush1.msra.mxu0 %v45
    %108 = vmatprep.subr.mxu0 0.0
    %109 = vmatpush1.msra.mxu0 %v46
    %110 = vmatprep.subr.mxu0 0.0
    %111 = vmatpush1.msra.mxu0 %v47
    %112 = vmatprep.subr.mxu0 0.0
    %113 = vmatpush1.msra.mxu0 %v48
    %114 = vmatprep.mubr.f32.mxu0 %v16
    %115 = vmatmul.mubr.f32.gmra.mrb[0].mxu0 %v15
    %v116 = vpop.f32.mrb[0].mxu0
    %v117 = vadd.f32 %v49, %v116
    %v118 = vpop.f32.mrb[0].mxu0
    %119 = vdwg.mxu0
    %120 = vst [vmem:[#allocation2] sm:$0xff] %v117
    // Predicated region
    $region14: #{c4_smaller_classifier.1} parent=1 // pred_check
      _
    $region15: #{c4_smaller_classifier.1} parent=1 // pred_check_branch
      %122 = sbr.rel (0) target = $region17
    $region16: #{c4_smaller_classifier.1} parent=1 // pred_region
      %s124 = ssub.s32 128, 128
      %125 = vsyncadd [#allocation3], %s124
      %s127 = sshll.u32 [#allocation2], 4
      %s128 = int_to_ptr.vmem [resolvable:$true] %s127
      %130 = dma.vmem_to_hbm [thread:$0]  %s128, 128, %s3, [#allocation3]
    $region17: #{c4_smaller_classifier.1} parent=1 // pred_fallthru
      _
    // Predicated region
    $region18: #{c4_smaller_classifier.1} parent=1 // pred_check
      _
    $region19: #{c4_smaller_classifier.1} parent=1 // pred_check_branch
      %132 = sbr.rel (0) target = $region21
    $region20: #{c4_smaller_classifier.1} parent=1 // pred_region
      %133 = dma.done [#allocation3], 128
    $region21: #{c4_smaller_classifier.1} parent=1 // pred_fallthru
      _
    %134 = vsyncpa [#allocation3], 1

</llo_original>
